<compile_context>
chip_gen: v6e
topology: v6e:2x2x1
jax: 0.10.0
libtpu: 0.0.40
codegen_flags: <defaults>
</compile_context>

<pallas_src>
import jax
import jax.numpy as jnp
from jax.experimental import pallas as pl
from jax.experimental.pallas import tpu as pltpu

K = 3        # conv kernel_size
STRIDE = 2   # conv stride
LANE = 128   # TPU lane width


def _round_up(x, m):
    return (x + m - 1) // m * m


# ---------------------------------------------------------------------------
# Kernel 1: Conv1d(Cin -> Cout, kernel_size=3, stride=2, padding=0) as a tiled
#           3-tap GEMM.  Per grid step: (TM, Cin) x 3 taps -> (TM, Cout_pad).
# ---------------------------------------------------------------------------
def _conv_k3s2_kernel(x0_ref, x1_ref, x2_ref, w0_ref, w1_ref, w2_ref, b_ref, o_ref):
    acc = jnp.dot(x0_ref[...], w0_ref[...], preferred_element_type=jnp.float32)
    acc = acc + jnp.dot(x1_ref[...], w1_ref[...], preferred_element_type=jnp.float32)
    acc = acc + jnp.dot(x2_ref[...], w2_ref[...], preferred_element_type=jnp.float32)
    o_ref[...] = (acc + b_ref[...]).astype(o_ref.dtype)


def conv1d_k3s2_nlc(x_nlc, weight, bias, *, compute_dtype=jnp.float32, tm_max=512):
    """Conv1d(k=3, s=2, valid) on NLC input (B, L, Cin) -> NLC output (B, Lout, Cout).

    weight: (Cout, Cin, 3) (PyTorch layout), bias: (Cout,).
    """
    B, L, Cin = x_nlc.shape
    Cout = weight.shape[0]
    Lout = (L - K) // STRIDE + 1
    assert Lout >= 1, "input too short for kernel_size=3, stride=2"

    M = B * Lout
    # TM: multiple of 8 (and of 128 for large M); sized so double-buffered tiles
    # stay far below VMEM limits on v5e/v6e/v7x.
    TM = min(tm_max, _round_up(M, 8))
    M_p = _round_up(M, TM)
    Cout_p = _round_up(Cout, LANE)

    # ---- glue: 3 strided tap slices (no XLA gather, no (M, Cin*K) im2col array) ----
    xs = []
    for k in range(K):
        xk = x_nlc[:, k:k + STRIDE * Lout:STRIDE, :]            # (B, Lout, Cin) strided slice
        xk = xk.reshape(M, Cin).astype(compute_dtype)
        xk = jnp.pad(xk, ((0, M_p - M), (0, 0)))
        xs.append(xk)

    ws = []
    for k in range(K):
        wk = weight[:, :, k].T.astype(compute_dtype)            # (Cin, Cout)
        wk = jnp.pad(wk, ((0, 0), (0, Cout_p - Cout)))          # zero-filled pad columns
        ws.append(wk)
    b2 = jnp.pad(bias.astype(jnp.float32).reshape(1, Cout), ((0, 0), (0, Cout_p - Cout)))

    bpe = jnp.dtype(compute_dtype).itemsize
    cost = pl.CostEstimate(
        flops=2 * M_p * Cin * K * Cout_p,
        bytes_accessed=(3 * M_p * Cin + K * Cin * Cout_p) * bpe + (M_p * Cout_p + Cout_p) * 4,
        transcendentals=0,
    )

    out = pl.pallas_call(
        _conv_k3s2_kernel,
        out_shape=jax.ShapeDtypeStruct((M_p, Cout_p), jnp.float32),
        grid=(M_p // TM,),
        in_specs=[
            pl.BlockSpec((TM, Cin), lambda i: (i, 0)),          # tap 0 (tiled, pipelined)
            pl.BlockSpec((TM, Cin), lambda i: (i, 0)),          # tap 1
            pl.BlockSpec((TM, Cin), lambda i: (i, 0)),          # tap 2
            pl.BlockSpec((Cin, Cout_p), lambda i: (0, 0)),      # w0 (resident)
            pl.BlockSpec((Cin, Cout_p), lambda i: (0, 0)),      # w1 (resident)
            pl.BlockSpec((Cin, Cout_p), lambda i: (0, 0)),      # w2 (resident)
            pl.BlockSpec((1, Cout_p), lambda i: (0, 0)),        # bias (resident)
        ],
        out_specs=pl.BlockSpec((TM, Cout_p), lambda i: (i, 0)),
        compiler_params=pltpu.CompilerParams(
            dimension_semantics=("parallel",),                  # megacore split on v7x
            vmem_limit_bytes=48 * 1024 * 1024,                  # safe on v5e/v6e/v7x
        ),
        cost_estimate=cost,
    )(xs[0], xs[1], xs[2], ws[0], ws[1], ws[2], b2)

    return out[:M, :Cout].reshape(B, Lout, Cout)


def conv1d_subsampling(x_ncl, w1, b1, w2, b2, *, compute_dtype=jnp.float32, tm_max=512):
    """Conv1dSubampling: two stacked Conv1d(k=3, s=2).

    Input is PyTorch NCL (B, features_length, L); output is NLC (B, T, d_model),
    i.e. the module's `src.permute(0, 2, 1)` is already folded in (no epilogue
    transpose of the conv output).
    """
    x_nlc = jnp.transpose(x_ncl, (0, 2, 1))
    h = conv1d_k3s2_nlc(x_nlc, w1, b1, compute_dtype=compute_dtype, tm_max=tm_max)
    h = conv1d_k3s2_nlc(h, w2, b2, compute_dtype=compute_dtype, tm_max=tm_max)
    return h


# ---------------------------------------------------------------------------
# Kernel 2: exit head = Linear(d_model, dec_voc_size) + log_softmax (fused).
# ---------------------------------------------------------------------------
def _linear_logsoftmax_kernel(x_ref, w_ref, b_ref, o_ref):
    z = jnp.dot(x_ref[...], w_ref[...], preferred_element_type=jnp.float32) + b_ref[...]
    m = jnp.max(z, axis=-1, keepdims=True)
    e = jnp.exp(z - m)
    s = jnp.sum(e, axis=-1, keepdims=True)
    o_ref[...] = (z - m - jnp.log(s)).astype(o_ref.dtype)


def linear_log_softmax(x_nlc, weight, bias, *, tm_max=512):
    """x: (B, T, D); weight: (V, D); bias: (V,) -> log-probs (B, T, V)."""
    B, T, D = x_nlc.shape
    V = weight.shape[0]
    M = B * T
    TM = min(tm_max, _round_up(M, 8))
    M_p = _round_up(M, TM)
    V_p = _round_up(V, LANE)

    x2 = jnp.pad(x_nlc.reshape(M, D).astype(jnp.float32), ((0, M_p - M), (0, 0)))
    w2 = jnp.pad(weight.T.astype(jnp.float32), ((0, 0), (0, V_p - V)))
    # padded vocab columns get a hugely negative bias -> zero probability mass
    b2 = jnp.pad(bias.astype(jnp.float32).reshape(1, V), ((0, 0), (0, V_p - V)),
                 constant_values=-1e30)

    out = pl.pallas_call(
        _linear_logsoftmax_kernel,
        out_shape=jax.ShapeDtypeStruct((M_p, V_p), jnp.float32),
        grid=(M_p // TM,),
        in_specs=[
            pl.BlockSpec((TM, D), lambda i: (i, 0)),
            pl.BlockSpec((D, V_p), lambda i: (0, 0)),
            pl.BlockSpec((1, V_p), lambda i: (0, 0)),
        ],
        out_specs=pl.BlockSpec((TM, V_p), lambda i: (i, 0)),
        compiler_params=pltpu.CompilerParams(
            dimension_semantics=("parallel",),
            vmem_limit_bytes=48 * 1024 * 1024,
        ),
        cost_estimate=pl.CostEstimate(
            flops=2 * M_p * D * V_p,
            bytes_accessed=(M_p * D + D * V_p + V_p + M_p * V_p) * 4,
            transcendentals=M_p * V_p,
        ),
    )(x2, w2, b2)

    return out[:M, :V].reshape(B, T, V)


# ---------------------------------------------------------------------------
# Pure-JAX references
# ---------------------------------------------------------------------------
def _ref_conv1d_ncl(x, weight, bias):
    out = jax.lax.conv_general_dilated(
        x, weight, window_strides=(STRIDE,), padding="VALID",
        dimension_numbers=("NCH", "OIH", "NCH"))
    return out + bias.reshape(1, -1, 1)


if __name__ == "__main__":
    key = jax.random.PRNGKey(0)
    k = jax.random.split(key, 7)

    # small shapes consistent with the module
    B, F, L = 2, 8, 32       # batch, features_length, input frames
    D = 16                   # d_model
    V = 32                   # dec_voc_size

    x = jax.random.normal(k[0], (B, F, L), dtype=jnp.float32)
    w1 = jax.random.normal(k[1], (D, F, K), dtype=jnp.float32) * 0.1
    b1 = jax.random.normal(k[2], (D,), dtype=jnp.float32) * 0.1
    w2 = jax.random.normal(k[3], (D, D, K), dtype=jnp.float32) * 0.1
    b2 = jax.random.normal(k[4], (D,), dtype=jnp.float32) * 0.1
    wl = jax.random.normal(k[5], (V, D), dtype=jnp.float32) * 0.1
    bl = jax.random.normal(k[6], (V,), dtype=jnp.float32) * 0.1

    # ---- Pallas forward: conv subsample (NLC out) + one exit head ----
    feats = conv1d_subsampling(x, w1, b1, w2, b2)            # (B, T, D)
    logp = linear_log_softmax(feats, wl, bl)                 # (B, T, V)
    feats, logp = jax.block_until_ready((feats, logp))

    # ---- references ----
    y = _ref_conv1d_ncl(_ref_conv1d_ncl(x, w1, b1), w2, b2)
    feats_ref = jnp.transpose(y, (0, 2, 1))
    logp_ref = jax.nn.log_softmax(feats_ref @ wl.T + bl, axis=-1)

    L1 = (L - K) // STRIDE + 1
    T = (L1 - K) // STRIDE + 1
    assert feats.shape == (B, T, D), feats.shape
    assert logp.shape == (B, T, V), logp.shape
    assert jnp.allclose(feats, feats_ref, atol=2e-3, rtol=2e-3), "conv subsample mismatch"
    assert jnp.allclose(logp, logp_ref, atol=2e-3, rtol=2e-3), "exit head mismatch"

    # bf16-fed MXU path (f32 accumulation) — looser tolerance
    feats_bf16 = conv1d_subsampling(x, w1, b1, w2, b2, compute_dtype=jnp.bfloat16)
    feats_bf16 = jax.block_until_ready(feats_bf16)
    assert jnp.allclose(feats_bf16, feats_ref, atol=5e-2, rtol=5e-2), "bf16 conv mismatch"

    print("KERNEL_OK")
</pallas_src>

<mosaic_0001>
module attributes {stable_mosaic.version = 11 : i64} {
  func.func @_conv_k3s2_kernel(%arg0: i32, %arg1: memref<32x8xf32, #tpu.memory_space<vmem>>, %arg2: memref<32x8xf32, #tpu.memory_space<vmem>>, %arg3: memref<32x8xf32, #tpu.memory_space<vmem>>, %arg4: memref<8x128xf32, #tpu.memory_space<vmem>>, %arg5: memref<8x128xf32, #tpu.memory_space<vmem>>, %arg6: memref<8x128xf32, #tpu.memory_space<vmem>>, %arg7: memref<1x128xf32, #tpu.memory_space<vmem>>, %arg8: memref<32x128xf32, #tpu.memory_space<vmem>>) attributes {dimension_semantics = [#tpu.dimension_semantics<parallel>], iteration_bounds = array<i64: 1>, scalar_prefetch = 0 : i64, scratch_operands = 0 : i64, tpu.core_type = #tpu.core_type<tc>, window_params = [{transform_indices = @transform_0, window_bounds = array<i64: 32, 8>}, {transform_indices = @transform_1, window_bounds = array<i64: 32, 8>}, {transform_indices = @transform_2, window_bounds = array<i64: 32, 8>}, {pipeline_mode = #tpu.pipeline_mode<synchronous>, transform_indices = @transform_3, window_bounds = array<i64: 8, 128>}, {pipeline_mode = #tpu.pipeline_mode<synchronous>, transform_indices = @transform_4, window_bounds = array<i64: 8, 128>}, {pipeline_mode = #tpu.pipeline_mode<synchronous>, transform_indices = @transform_5, window_bounds = array<i64: 8, 128>}, {pipeline_mode = #tpu.pipeline_mode<synchronous>, transform_indices = @transform_6, window_bounds = array<i64: 1, 128>}, {transform_indices = @transform_7, window_bounds = array<i64: 32, 128>}]} {
    %c0 = arith.constant 0 : index
    %c0_0 = arith.constant 0 : index
    %0 = vector.load %arg1[%c0, %c0_0] : memref<32x8xf32, #tpu.memory_space<vmem>>, vector<32x8xf32>
    %c0_1 = arith.constant 0 : index
    %c0_2 = arith.constant 0 : index
    %1 = vector.load %arg4[%c0_1, %c0_2] : memref<8x128xf32, #tpu.memory_space<vmem>>, vector<8x128xf32>
    %cst = arith.constant dense<0.000000e+00> : vector<32x128xf32>
    %2 = tpu.matmul %0, %1, %cst {dimension_numbers = #tpu.dot_dimension_numbers<[1], [0], [0], [1], [0, 0, 1, 1], [], []>} : vector<32x8xf32>, vector<8x128xf32>, vector<32x128xf32> -> vector<32x128xf32>
    %c0_3 = arith.constant 0 : index
    %c0_4 = arith.constant 0 : index
    %3 = vector.load %arg2[%c0_3, %c0_4] : memref<32x8xf32, #tpu.memory_space<vmem>>, vector<32x8xf32>
    %c0_5 = arith.constant 0 : index
    %c0_6 = arith.constant 0 : index
    %4 = vector.load %arg5[%c0_5, %c0_6] : memref<8x128xf32, #tpu.memory_space<vmem>>, vector<8x128xf32>
    %cst_7 = arith.constant dense<0.000000e+00> : vector<32x128xf32>
    %5 = tpu.matmul %3, %4, %cst_7 {dimension_numbers = #tpu.dot_dimension_numbers<[1], [0], [0], [1], [0, 0, 1, 1], [], []>} : vector<32x8xf32>, vector<8x128xf32>, vector<32x128xf32> -> vector<32x128xf32>
    %6 = arith.addf %2, %5 : vector<32x128xf32>
    %c0_8 = arith.constant 0 : index
    %c0_9 = arith.constant 0 : index
    %7 = vector.load %arg3[%c0_8, %c0_9] : memref<32x8xf32, #tpu.memory_space<vmem>>, vector<32x8xf32>
    %c0_10 = arith.constant 0 : index
    %c0_11 = arith.constant 0 : index
    %8 = vector.load %arg6[%c0_10, %c0_11] : memref<8x128xf32, #tpu.memory_space<vmem>>, vector<8x128xf32>
    %cst_12 = arith.constant dense<0.000000e+00> : vector<32x128xf32>
    %9 = tpu.matmul %7, %8, %cst_12 {dimension_numbers = #tpu.dot_dimension_numbers<[1], [0], [0], [1], [0, 0, 1, 1], [], []>} : vector<32x8xf32>, vector<8x128xf32>, vector<32x128xf32> -> vector<32x128xf32>
    %10 = arith.addf %6, %9 : vector<32x128xf32>
    %c0_13 = arith.constant 0 : index
    %c0_14 = arith.constant 0 : index
    %11 = vector.load %arg7[%c0_13, %c0_14] : memref<1x128xf32, #tpu.memory_space<vmem>>, vector<1x128xf32>
    %12 = vector.broadcast %11 : vector<1x128xf32> to vector<32x128xf32>
    %13 = arith.addf %10, %12 : vector<32x128xf32>
    %c0_15 = arith.constant 0 : index
    %c0_16 = arith.constant 0 : index
    %14 = vector.load %arg8[%c0_15, %c0_16] : memref<32x128xf32, #tpu.memory_space<vmem>>, vector<32x128xf32>
    tpu.vector_store %arg8[%c0_15, %c0_16], %13 {strides = array<i32>} : memref<32x128xf32, #tpu.memory_space<vmem>>, vector<32x128xf32>,
    return
  }
  func.func @transform_0(%arg0: i32) -> (i32, i32) {
    %c0_i32 = arith.constant 0 : i32
    %c0_i32_0 = arith.constant 0 : i32
    return %arg0, %c0_i32 : i32, i32
  }
  func.func @transform_1(%arg0: i32) -> (i32, i32) {
    %c0_i32 = arith.constant 0 : i32
    %c0_i32_0 = arith.constant 0 : i32
    return %arg0, %c0_i32 : i32, i32
  }
  func.func @transform_2(%arg0: i32) -> (i32, i32) {
    %c0_i32 = arith.constant 0 : i32
    %c0_i32_0 = arith.constant 0 : i32
    return %arg0, %c0_i32 : i32, i32
  }
  func.func @transform_3(%arg0: i32) -> (i32, i32) {
    %c0_i32 = arith.constant 0 : i32
    %c0_i32_0 = arith.constant 0 : i32
    %c0_i32_1 = arith.constant 0 : i32
    return %c0_i32, %c0_i32_0 : i32, i32
  }
  func.func @transform_4(%arg0: i32) -> (i32, i32) {
    %c0_i32 = arith.constant 0 : i32
    %c0_i32_0 = arith.constant 0 : i32
    %c0_i32_1 = arith.constant 0 : i32
    return %c0_i32, %c0_i32_0 : i32, i32
  }
  func.func @transform_5(%arg0: i32) -> (i32, i32) {
    %c0_i32 = arith.constant 0 : i32
    %c0_i32_0 = arith.constant 0 : i32
    %c0_i32_1 = arith.constant 0 : i32
    return %c0_i32, %c0_i32_0 : i32, i32
  }
  func.func @transform_6(%arg0: i32) -> (i32, i32) {
    %c0_i32 = arith.constant 0 : i32
    %c0_i32_0 = arith.constant 0 : i32
    %c0_i32_1 = arith.constant 0 : i32
    return %c0_i32, %c0_i32_0 : i32, i32
  }
  func.func @transform_7(%arg0: i32) -> (i32, i32) {
    %c0_i32 = arith.constant 0 : i32
    %c0_i32_0 = arith.constant 0 : i32
    return %arg0, %c0_i32 : i32, i32
  }
}

</mosaic_0001>

<llo_original>
// kernel: tpu_custom_call.1
$region0: #{tpu_custom_call.1}
  #allocation0 [shape = 'u32[]', space=smem, size = 0x4, offset = 0x4, fixed_abs, tag = 'smem constant byte address 0x4 - core index']
  #allocation1 [shape = 'u32[144,128]{1,0:T(1,128)}', space=vmem, size = 0x12000, scoped, tag = 'internal scratch']
  %s0 = inlined_call_operand.vmem [shape: f32[32,8], index: 0, kind: input, shape index: {}]
  %s1 = inlined_call_operand.vmem [shape: f32[32,8], index: 1, kind: input, shape index: {}]
  %s2 = inlined_call_operand.vmem [shape: f32[32,8], index: 2, kind: input, shape index: {}]
  %s3 = inlined_call_operand.vmem [shape: f32[8,128], index: 3, kind: input, shape index: {}]
  %s4 = inlined_call_operand.vmem [shape: f32[8,128], index: 4, kind: input, shape index: {}]
  %s5 = inlined_call_operand.vmem [shape: f32[8,128], index: 5, kind: input, shape index: {}]
  %s6 = inlined_call_operand.vmem [shape: f32[1,128], index: 6, kind: input, shape index: {}]
  %s7 = inlined_call_operand.hbm [shape: f32[32,128], index: 7, kind: output, shape index: {}]
  %s8 = sld [smem:[#allocation0]]
  $region38: #{tpu_custom_call.1} parent=0
    _
  %s10 = ssub.s32 1, %s8
  %s11 = scalar_select 0, %s10, %s8
  $region1: #{tpu_custom_call.1} parent=0
    #allocation2 [shape = 'u8[16384]{0}', space=vmem, size = 0x4000, scoped, tag = 'output window, operand 0, single buffered']
    #allocation3 [shape = 's32[1]{0}', space=sflag, size = 0x4, scoped, tag = 'scoped memory for tpu_custom_call.1']
    %12 = vsyncpa [#allocation3], 0
    // Predicated region
    $region2: #{tpu_custom_call.1} parent=1 // pred_check
      _
    $region3: #{tpu_custom_call.1} parent=1 // pred_check_branch
      %14 = sbr.rel (0) target = $region5
    $region4: #{tpu_custom_call.1} parent=1 // pred_region
      _
    $region5: #{tpu_custom_call.1} parent=1 // pred_fallthru
      _
    // Predicated region
    $region6: #{tpu_custom_call.1} parent=1 // pred_check
      _
    $region7: #{tpu_custom_call.1} parent=1 // pred_check_branch
      %16 = sbr.rel (0) target = $region9
    $region8: #{tpu_custom_call.1} parent=1 // pred_region
      _
    $region9: #{tpu_custom_call.1} parent=1 // pred_fallthru
      _
    // Predicated region
    $region10: #{tpu_custom_call.1} parent=1 // pred_check
      _
    $region11: #{tpu_custom_call.1} parent=1 // pred_check_branch
      %18 = sbr.rel (0) target = $region13
    $region12: #{tpu_custom_call.1} parent=1 // pred_region
      _
    $region13: #{tpu_custom_call.1} parent=1 // pred_fallthru
      _
    // Predicated region
    $region14: #{tpu_custom_call.1} parent=1 // pred_check
      _
    $region15: #{tpu_custom_call.1} parent=1 // pred_check_branch
      %20 = sbr.rel (0) target = $region17
    $region16: #{tpu_custom_call.1} parent=1 // pred_region
      _
    $region17: #{tpu_custom_call.1} parent=1 // pred_fallthru
      _
    // Predicated region
    $region18: #{tpu_custom_call.1} parent=1 // pred_check
      _
    $region19: #{tpu_custom_call.1} parent=1 // pred_check_branch
      %22 = sbr.rel (0) target = $region21
    $region20: #{tpu_custom_call.1} parent=1 // pred_region
      _
    $region21: #{tpu_custom_call.1} parent=1 // pred_fallthru
      _
    // Predicated region
    $region22: #{tpu_custom_call.1} parent=1 // pred_check
      _
    $region23: #{tpu_custom_call.1} parent=1 // pred_check_branch
      %24 = sbr.rel (0) target = $region25
    $region24: #{tpu_custom_call.1} parent=1 // pred_region
      _
    $region25: #{tpu_custom_call.1} parent=1 // pred_fallthru
      _
    // Predicated region
    $region26: #{tpu_custom_call.1} parent=1 // pred_check
      _
    $region27: #{tpu_custom_call.1} parent=1 // pred_check_branch
      %26 = sbr.rel (0) target = $region29
    $region28: #{tpu_custom_call.1} parent=1 // pred_region
      _
    $region29: #{tpu_custom_call.1} parent=1 // pred_fallthru
      _
    %v27 = vld [vmem:[%s0] sm:$0xff]
    %v28 = vld [vmem:[%s0 + $0x8] sm:$0xff]
    %v29 = vld [vmem:[%s0 + $0x10] sm:$0xff]
    %v30 = vld [vmem:[%s0 + $0x18] sm:$0xff]
    %v31 = vld [vmem:[%s3] sm:$0xff]
    %v32 = vld [vmem:[%s1] sm:$0xff]
    %v33 = vld [vmem:[%s1 + $0x8] sm:$0xff]
    %v34 = vld [vmem:[%s1 + $0x10] sm:$0xff]
    %v35 = vld [vmem:[%s1 + $0x18] sm:$0xff]
    %v36 = vld [vmem:[%s4] sm:$0xff]
    %vm37 = vcmask 64512
    %v39 = vsel %vm37, %v32, 0
    %v42 = vsel %vm37, %v33, 0
    %v45 = vsel %vm37, %v34, 0
    %v48 = vsel %vm37, %v35, 0
    %50 = vmatprep.subr.mxu0 0.0
    %51 = vmatpush1.msra.mxu0 0.0
    %52 = vmatprep.subr.mxu0 0.0
    %53 = vmatpush1.msra.mxu0 0.0
    %54 = vmatprep.subr.mxu0 0.0
    %55 = vmatpush1.msra.mxu0 0.0
    %56 = vmatprep.subr.mxu0 0.0
    %57 = vmatpush1.msra.mxu0 0.0
    %58 = vmatprep.subr.mxu0 0.0
    %59 = vmatpush1.msra.mxu0 0.0
    %60 = vmatprep.subr.mxu0 0.0
    %61 = vmatpush1.msra.mxu0 0.0
    %62 = vmatprep.subr.mxu0 0.0
    %63 = vmatpush1.msra.mxu0 0.0
    %64 = vmatprep.subr.mxu0 0.0
    %65 = vmatpush1.msra.mxu0 0.0
    %66 = vmatprep.subr.mxu0 0.0
    %67 = vmatpush1.msra.mxu0 0.0
    %68 = vmatprep.subr.mxu0 0.0
    %69 = vmatpush1.msra.mxu0 0.0
    %70 = vmatprep.subr.mxu0 0.0
    %71 = vmatpush1.msra.mxu0 0.0
    %72 = vmatprep.subr.mxu0 0.0
    %73 = vmatpush1.msra.mxu0 0.0
    %74 = vmatprep.subr.mxu0 0.0
    %75 = vmatpush1.msra.mxu0 0.0
    %76 = vmatprep.subr.mxu0 0.0
    %77 = vmatpush1.msra.mxu0 0.0
    %78 = vmatprep.subr.mxu0 0.0
    %79 = vmatpush1.msra.mxu0 0.0
    %80 = vmatprep.subr.mxu0 0.0
    %81 = vmatpush1.msra.mxu0 %v36
    %82 = vmatprep.subr.mxu0 0.0
    %83 = vmatpush2.msra.mxu0 0.0
    %84 = vmatprep.subr.mxu0 0.0
    %85 = vmatpush2.msra.mxu0 0.0
    %86 = vmatprep.subr.mxu0 0.0
    %87 = vmatpush2.msra.mxu0 0.0
    %88 = vmatprep.subr.mxu0 0.0
    %89 = vmatpush2.msra.mxu0 0.0
    %90 = vmatprep.subr.mxu0 0.0
    %91 = vmatpush2.msra.mxu0 0.0
    %92 = vmatprep.subr.mxu0 0.0
    %93 = vmatpush2.msra.mxu0 0.0
    %94 = vmatprep.subr.mxu0 0.0
    %95 = vmatpush2.msra.mxu0 0.0
    %96 = vmatprep.subr.mxu0 0.0
    %97 = vmatpush2.msra.mxu0 0.0
    %98 = vmatprep.subr.mxu0 0.0
    %99 = vmatpush2.msra.mxu0 0.0
    %100 = vmatprep.subr.mxu0 0.0
    %101 = vmatpush2.msra.mxu0 0.0
    %102 = vmatprep.subr.mxu0 0.0
    %103 = vmatpush2.msra.mxu0 0.0
    %104 = vmatprep.subr.mxu0 0.0
    %105 = vmatpush2.msra.mxu0 0.0
    %106 = vmatprep.subr.mxu0 0.0
    %107 = vmatpush2.msra.mxu0 0.0
    %108 = vmatprep.subr.mxu0 0.0
    %109 = vmatpush2.msra.mxu0 0.0
    %110 = vmatprep.subr.mxu0 0.0
    %111 = vmatpush2.msra.mxu0 0.0
    %112 = vmatprep.subr.mxu0 0.0
    %113 = vmatpush2.msra.mxu0 0.0
    %114 = vmatprep.mubr.f32.mxu0 0.0
    %115 = vmatmul.mubr.f32.gmra.mxu0 %v39
    %v116 = vpop.f32.mrf.mxu0
    %v117 = vadd.f32 0.0, %v116
    %v118 = vpop.f32.mrf.mxu0
    %119 = vmatprep.mubr.f32.mxu0 0.0
    %120 = vmatmul.mubr.f32.gmra.mxu0 %v42
    %v121 = vpop.f32.mrf.mxu0
    %v122 = vadd.f32 0.0, %v121
    %v123 = vpop.f32.mrf.mxu0
    %124 = vmatprep.mubr.f32.mxu0 0.0
    %125 = vmatmul.mubr.f32.gmra.mxu0 %v45
    %v126 = vpop.f32.mrf.mxu0
    %v127 = vadd.f32 0.0, %v126
    %v128 = vpop.f32.mrf.mxu0
    %129 = vmatprep.mubr.f32.mxu0 0.0
    %130 = vmatmul.mubr.f32.gmra.mxu0 %v48
    %v131 = vpop.f32.mrf.mxu0
    %v132 = vadd.f32 0.0, %v131
    %v133 = vpop.f32.mrf.mxu0
    %134 = vdwg.mxu0
    %v136 = vsel %vm37, %v27, 0
    %v139 = vsel %vm37, %v28, 0
    %v142 = vsel %vm37, %v29, 0
    %v145 = vsel %vm37, %v30, 0
    %147 = vmatprep.subr.mxu0 0.0
    %148 = vmatpush1.msra.mxu0 0.0
    %149 = vmatprep.subr.mxu0 0.0
    %150 = vmatpush1.msra.mxu0 0.0
    %151 = vmatprep.subr.mxu0 0.0
    %152 = vmatpush1.msra.mxu0 0.0
    %153 = vmatprep.subr.mxu0 0.0
    %154 = vmatpush1.msra.mxu0 0.0
    %155 = vmatprep.subr.mxu0 0.0
    %156 = vmatpush1.msra.mxu0 0.0
    %157 = vmatprep.subr.mxu0 0.0
    %158 = vmatpush1.msra.mxu0 0.0
    %159 = vmatprep.subr.mxu0 0.0
    %160 = vmatpush1.msra.mxu0 0.0
    %161 = vmatprep.subr.mxu0 0.0
    %162 = vmatpush1.msra.mxu0 0.0
    %163 = vmatprep.subr.mxu0 0.0
    %164 = vmatpush1.msra.mxu0 0.0
    %165 = vmatprep.subr.mxu0 0.0
    %166 = vmatpush1.msra.mxu0 0.0
    %167 = vmatprep.subr.mxu0 0.0
    %168 = vmatpush1.msra.mxu0 0.0
    %169 = vmatprep.subr.mxu0 0.0
    %170 = vmatpush1.msra.mxu0 0.0
    %171 = vmatprep.subr.mxu0 0.0
    %172 = vmatpush1.msra.mxu0 0.0
    %173 = vmatprep.subr.mxu0 0.0
    %174 = vmatpush1.msra.mxu0 0.0
    %175 = vmatprep.subr.mxu0 0.0
    %176 = vmatpush1.msra.mxu0 0.0
    %177 = vmatprep.subr.mxu0 0.0
    %178 = vmatpush1.msra.mxu0 %v31
    %179 = vmatprep.subr.mxu0 0.0
    %180 = vmatpush2.msra.mxu0 0.0
    %181 = vmatprep.subr.mxu0 0.0
    %182 = vmatpush2.msra.mxu0 0.0
    %183 = vmatprep.subr.mxu0 0.0
    %184 = vmatpush2.msra.mxu0 0.0
    %185 = vmatprep.subr.mxu0 0.0
    %186 = vmatpush2.msra.mxu0 0.0
    %187 = vmatprep.subr.mxu0 0.0
    %188 = vmatpush2.msra.mxu0 0.0
    %189 = vmatprep.subr.mxu0 0.0
    %190 = vmatpush2.msra.mxu0 0.0
    %191 = vmatprep.subr.mxu0 0.0
    %192 = vmatpush2.msra.mxu0 0.0
    %193 = vmatprep.subr.mxu0 0.0
    %194 = vmatpush2.msra.mxu0 0.0
    %195 = vmatprep.subr.mxu0 0.0
    %196 = vmatpush2.msra.mxu0 0.0
    %197 = vmatprep.subr.mxu0 0.0
    %198 = vmatpush2.msra.mxu0 0.0
    %199 = vmatprep.subr.mxu0 0.0
    %200 = vmatpush2.msra.mxu0 0.0
    %201 = vmatprep.subr.mxu0 0.0
    %202 = vmatpush2.msra.mxu0 0.0
    %203 = vmatprep.subr.mxu0 0.0
    %204 = vmatpush2.msra.mxu0 0.0
    %205 = vmatprep.subr.mxu0 0.0
    %206 = vmatpush2.msra.mxu0 0.0
    %207 = vmatprep.subr.mxu0 0.0
    %208 = vmatpush2.msra.mxu0 0.0
    %209 = vmatprep.subr.mxu0 0.0
    %210 = vmatpush2.msra.mxu0 0.0
    %211 = vmatprep.mubr.f32.mxu0 0.0
    %212 = vmatmul.mubr.f32.gmra.mxu0 %v136
    %v213 = vpop.f32.mrf.mxu0
    %v214 = vadd.f32 %v117, %v213
    %v215 = vpop.f32.mrf.mxu0
    %216 = vmatprep.mubr.f32.mxu0 0.0
    %217 = vmatmul.mubr.f32.gmra.mxu0 %v139
    %v218 = vpop.f32.mrf.mxu0
    %v219 = vadd.f32 %v122, %v218
    %v220 = vpop.f32.mrf.mxu0
    %221 = vmatprep.mubr.f32.mxu0 0.0
    %222 = vmatmul.mubr.f32.gmra.mxu0 %v142
    %v223 = vpop.f32.mrf.mxu0
    %v224 = vadd.f32 %v127, %v223
    %v225 = vpop.f32.mrf.mxu0
    %226 = vmatprep.mubr.f32.mxu0 0.0
    %227 = vmatmul.mubr.f32.gmra.mxu0 %v145
    %v228 = vpop.f32.mrf.mxu0
    %v229 = vadd.f32 %v132, %v228
    %v230 = vpop.f32.mrf.mxu0
    %231 = vdwg.mxu0
    %v232 = vld [vmem:[%s2] sm:$0xff]
    %v233 = vld [vmem:[%s2 + $0x8] sm:$0xff]
    %v234 = vld [vmem:[%s2 + $0x10] sm:$0xff]
    %v235 = vld [vmem:[%s2 + $0x18] sm:$0xff]
    %v236 = vld [vmem:[%s5] sm:$0xff]
    %v238 = vsel %vm37, %v232, 0
    %v241 = vsel %vm37, %v233, 0
    %v244 = vsel %vm37, %v234, 0
    %v247 = vsel %vm37, %v235, 0
    %249 = vmatprep.subr.mxu0 0.0
    %250 = vmatpush1.msra.mxu0 0.0
    %251 = vmatprep.subr.mxu0 0.0
    %252 = vmatpush1.msra.mxu0 0.0
    %253 = vmatprep.subr.mxu0 0.0
    %254 = vmatpush1.msra.mxu0 0.0
    %255 = vmatprep.subr.mxu0 0.0
    %256 = vmatpush1.msra.mxu0 0.0
    %257 = vmatprep.subr.mxu0 0.0
    %258 = vmatpush1.msra.mxu0 0.0
    %259 = vmatprep.subr.mxu0 0.0
    %260 = vmatpush1.msra.mxu0 0.0
    %261 = vmatprep.subr.mxu0 0.0
    %262 = vmatpush1.msra.mxu0 0.0
    %263 = vmatprep.subr.mxu0 0.0
    %264 = vmatpush1.msra.mxu0 0.0
    %265 = vmatprep.subr.mxu0 0.0
    %266 = vmatpush1.msra.mxu0 0.0
    %267 = vmatprep.subr.mxu0 0.0
    %268 = vmatpush1.msra.mxu0 0.0
    %269 = vmatprep.subr.mxu0 0.0
    %270 = vmatpush1.msra.mxu0 0.0
    %271 = vmatprep.subr.mxu0 0.0
    %272 = vmatpush1.msra.mxu0 0.0
    %273 = vmatprep.subr.mxu0 0.0
    %274 = vmatpush1.msra.mxu0 0.0
    %275 = vmatprep.subr.mxu0 0.0
    %276 = vmatpush1.msra.mxu0 0.0
    %277 = vmatprep.subr.mxu0 0.0
    %278 = vmatpush1.msra.mxu0 0.0
    %279 = vmatprep.subr.mxu0 0.0
    %280 = vmatpush1.msra.mxu0 %v236
    %281 = vmatprep.subr.mxu0 0.0
    %282 = vmatpush2.msra.mxu0 0.0
    %283 = vmatprep.subr.mxu0 0.0
    %284 = vmatpush2.msra.mxu0 0.0
    %285 = vmatprep.subr.mxu0 0.0
    %286 = vmatpush2.msra.mxu0 0.0
    %287 = vmatprep.subr.mxu0 0.0
    %288 = vmatpush2.msra.mxu0 0.0
    %289 = vmatprep.subr.mxu0 0.0
    %290 = vmatpush2.msra.mxu0 0.0
    %291 = vmatprep.subr.mxu0 0.0
    %292 = vmatpush2.msra.mxu0 0.0
    %293 = vmatprep.subr.mxu0 0.0
    %294 = vmatpush2.msra.mxu0 0.0
    %295 = vmatprep.subr.mxu0 0.0
    %296 = vmatpush2.msra.mxu0 0.0
    %297 = vmatprep.subr.mxu0 0.0
    %298 = vmatpush2.msra.mxu0 0.0
    %299 = vmatprep.subr.mxu0 0.0
    %300 = vmatpush2.msra.mxu0 0.0
    %301 = vmatprep.subr.mxu0 0.0
    %302 = vmatpush2.msra.mxu0 0.0
    %303 = vmatprep.subr.mxu0 0.0
    %304 = vmatpush2.msra.mxu0 0.0
    %305 = vmatprep.subr.mxu0 0.0
    %306 = vmatpush2.msra.mxu0 0.0
    %307 = vmatprep.subr.mxu0 0.0
    %308 = vmatpush2.msra.mxu0 0.0
    %309 = vmatprep.subr.mxu0 0.0
    %310 = vmatpush2.msra.mxu0 0.0
    %311 = vmatprep.subr.mxu0 0.0
    %312 = vmatpush2.msra.mxu0 0.0
    %313 = vmatprep.mubr.f32.mxu0 0.0
    %314 = vmatmul.mubr.f32.gmra.mxu0 %v238
    %v315 = vpop.f32.mrf.mxu0
    %v316 = vadd.f32 0.0, %v315
    %v317 = vpop.f32.mrf.mxu0
    %318 = vmatprep.mubr.f32.mxu0 0.0
    %319 = vmatmul.mubr.f32.gmra.mxu0 %v241
    %v320 = vpop.f32.mrf.mxu0
    %v321 = vadd.f32 0.0, %v320
    %v322 = vpop.f32.mrf.mxu0
    %323 = vmatprep.mubr.f32.mxu0 0.0
    %324 = vmatmul.mubr.f32.gmra.mxu0 %v244
    %v325 = vpop.f32.mrf.mxu0
    %v326 = vadd.f32 0.0, %v325
    %v327 = vpop.f32.mrf.mxu0
    %328 = vmatprep.mubr.f32.mxu0 0.0
    %329 = vmatmul.mubr.f32.gmra.mxu0 %v247
    %v330 = vpop.f32.mrf.mxu0
    %v331 = vadd.f32 0.0, %v330
    %v332 = vpop.f32.mrf.mxu0
    %333 = vdwg.mxu0
    %v334 = vadd.f32 %v214, %v316
    %v335 = vadd.f32 %v219, %v321
    %v336 = vadd.f32 %v224, %v326
    %v337 = vadd.f32 %v229, %v331
    %v338 = vld [vmem:[%s6] sm:$0x1]
    %v340 = vlaneseq
    %v341 = vshrl.u32 %v340, 7
    %v342 = vsub.s32 0, %v341
    %v343 = vrot.slane %v338, %v342
    %v345 = vadd.f32 %v334, %v343
    %v346 = vadd.f32 %v335, %v343
    %v347 = vadd.f32 %v336, %v343
    %v348 = vadd.f32 %v337, %v343
    %349 = vst [vmem:[#allocation2] sm:$0xff] %v345
    %350 = vst [vmem:[#allocation2 + $0x8] sm:$0xff] %v346
    %351 = vst [vmem:[#allocation2 + $0x10] sm:$0xff] %v347
    %352 = vst [vmem:[#allocation2 + $0x18] sm:$0xff] %v348
    // Predicated region
    $region30: #{tpu_custom_call.1} parent=1 // pred_check
      _
    $region31: #{tpu_custom_call.1} parent=1 // pred_check_branch
      %354 = sbr.rel (0) target = $region33
    $region32: #{tpu_custom_call.1} parent=1 // pred_region
      %s356 = ssub.s32 512, 512
      %357 = vsyncadd [#allocation3], %s356
      %s358 = sshll.u32 [#allocation2], 4
      %s359 = int_to_ptr.vmem [resolvable:$true] %s358
      %364 = dma.vmem_to_hbm [thread:$0]  %s359, 512, %s7, [#allocation3], 128, 128, 8
    $region33: #{tpu_custom_call.1} parent=1 // pred_fallthru
      _
    // Predicated region
    $region34: #{tpu_custom_call.1} parent=1 // pred_check
      _
    $region35: #{tpu_custom_call.1} parent=1 // pred_check_branch
      %366 = sbr.rel (0) target = $region37
    $region36: #{tpu_custom_call.1} parent=1 // pred_region
      %367 = dma.done [#allocation3], 512
    $region37: #{tpu_custom_call.1} parent=1 // pred_fallthru
      _
    %368 = vsyncpa [#allocation3], 1

</llo_original>
